<compile_context>
chip_gen: v5e
topology: v5e:2x2
jax: 0.10.0
libtpu: 0.0.40
codegen_flags: <defaults>
</compile_context>

<pallas_src>
import functools

import jax
import jax.numpy as jnp
from jax.experimental import pallas as pl
from jax.experimental.pallas import tpu as pltpu

IGNORE_INDEX = -100
_MASK_VALUE = -1e30  # large finite negative (never -inf -> no NaN on empty-ish tiles)


def _round_up(x, m):
    return ((x + m - 1) // m) * m


def _vmem_capacity_bytes():
    try:
        info = pltpu.get_tpu_info()
        cap = getattr(info, "vmem_capacity_bytes", None)
        if cap:
            return int(cap)
    except Exception:
        pass
    return 64 * 1024 * 1024  # conservative: v7x per-TensorCore physical VMEM


def _vmem_footprint(tn, tv, h, h_bytes, w_bytes):
    """Conservative per-step VMEM model (assumes every block double-buffered)."""
    weight = 2 * tv * h * w_bytes        # streamed (TV, H) weight slab
    hidden = 2 * tn * h * h_bytes        # resident (TN, H) hidden tile (worst case)
    logits = 2 * tn * tv * 4             # f32 logits + elementwise temporaries
    small = (2 + 2 + 3) * tn * 4         # labels, per-row out, 3 scratch accumulators
    return weight + hidden + logits + small


def _choose_tiles(n, v, h, h_bytes, w_bytes, budget):
    """Maximize TN (weight-stream arithmetic intensity) first, then TV."""
    n_cap = _round_up(max(n, 1), 8)
    tn_cands = sorted({min(t, n_cap)
                       for t in (1024, 768, 512, 384, 256, 128, 64, 32, 16, 8)},
                      reverse=True)
    if v >= 128:
        tv_cands = [t for t in (2048, 1024, 512, 256, 128) if t <= v]
    else:  # tiny-vocab corner case (tests only)
        tv_cands = [_round_up(max(v, 1), 8)]
    for tv_floor in (512, 256, 128, 8):
        for tn in tn_cands:
            for tv in tv_cands:
                if tv < tv_floor:
                    continue
                if _vmem_footprint(tn, tv, h, h_bytes, w_bytes) <= budget:
                    return tn, tv
    return tn_cands[-1], tv_cands[-1]


def _lm_head_loss_kernel(labels_ref, h_ref, w_ref, loss_ref,
                         m_sc, l_sc, t_sc, *, v_total, tv, ragged_v):
    # labels_ref: (TN, 1) int32   h_ref: (TN, H)   w_ref: (TV, H)
    # loss_ref:   (TN, 1) f32 per-row loss (written at the last V step only)
    # m_sc/l_sc/t_sc: (TN, 1) f32 running max / expsum / target logit
    j = pl.program_id(1)

    @pl.when(j == 0)
    def _init():
        m_sc[...] = jnp.full_like(m_sc, _MASK_VALUE)
        l_sc[...] = jnp.zeros_like(l_sc)
        t_sc[...] = jnp.zeros_like(t_sc)

    # (TN, H) x (TV, H) -> (TN, TV): contract dim 1 of both operands (weight kept
    # in its row-major (V, H) layout; q.kT MXU orientation, no per-step transpose).
    logits = jax.lax.dot_general(
        h_ref[...], w_ref[...],
        dimension_numbers=(((1,), (1,)), ((), ())),
        preferred_element_type=jnp.float32)                        # (TN, TV) f32

    # j-independent (1, TV) lane iota; j enters only via scalar offsets below, so
    # no (TN, TV) int32 materialization / add per step.
    col = jax.lax.broadcasted_iota(jnp.int32, (1, tv), 1)

    if ragged_v:
        # Only the final V tile has invalid columns; for earlier tiles
        # v_total - j*tv >= tv, so this (1, TV) compare is all-true and the
        # select is a no-op.  Use a select (not an additive bias) so any
        # inf/NaN garbage in the out-of-bounds weight rows cannot leak into
        # the max / expsum.
        col_ok = col < (v_total - j * tv)
        logits = jnp.where(col_ok, logits, _MASK_VALUE)

    labels = labels_ref[...]                                        # (TN, 1) int32

    # Target-logit accumulation: at most one V tile matches each row's label;
    # IGNORE_INDEX (-100) never matches the non-negative iota.
    t_sc[...] += jnp.sum(jnp.where(col == (labels - j * tv), logits, 0.0),
                         axis=-1, keepdims=True)

    # Online logsumexp update.
    m_prev = m_sc[...]
    m_new = jnp.maximum(m_prev, jnp.max(logits, axis=-1, keepdims=True))
    l_sc[...] = (l_sc[...] * jnp.exp(m_prev - m_new)
                 + jnp.sum(jnp.exp(logits - m_new), axis=-1, keepdims=True))
    m_sc[...] = m_new

    @pl.when(j == pl.num_programs(1) - 1)
    def _finalize():
        lse = m_sc[...] + jnp.log(l_sc[...])
        valid = labels != IGNORE_INDEX
        loss_ref[...] = jnp.where(valid, lse - t_sc[...], 0.0)


def lm_head_loss(hidden_states, labels, lm_head_weight, *, tn=None, tv=None):
    """hidden_states: (N, H); labels: (N,) int; lm_head_weight: (V, H) (PyTorch layout).

    Returns sum_i CrossEntropy(logits_i, labels_i) with ignore_index=-100,
    reduction='sum' (forward of _LM_head / LMheadWarpper).
    """
    n, h = hidden_states.shape
    v, h2 = lm_head_weight.shape
    assert h == h2, "hidden size mismatch"

    h_bytes = jnp.dtype(hidden_states.dtype).itemsize
    w_bytes = jnp.dtype(lm_head_weight.dtype).itemsize

    vmem_cap = _vmem_capacity_bytes()
    if tn is None or tv is None:
        auto_tn, auto_tv = _choose_tiles(n, v, h, h_bytes, w_bytes,
                                         budget=int(0.6 * vmem_cap))
        tn = auto_tn if tn is None else tn
        tv = auto_tv if tv is None else tv
    assert tn % 8 == 0 and tv % 8 == 0, "tile sizes must be multiples of 8"

    # --- N axis: pad rows up to a tile multiple (cheap: N x H bytes, not V x H).
    n_pad = _round_up(n, tn)
    labels_i32 = labels.astype(jnp.int32)
    if n_pad != n:
        hidden_states = jnp.pad(hidden_states, ((0, n_pad - n), (0, 0)))
        labels_i32 = jnp.pad(labels_i32, (0, n_pad - n),
                             constant_values=IGNORE_INDEX)
    labels2d = labels_i32.reshape(n_pad, 1)

    # --- V axis: never materialize a padded copy of the full (V, H) weight; the
    # ragged last tile is masked in-kernel.  (Only the tiny-vocab corner case
    # tv > V pads, and that copy is smaller than a single tile.)
    weight_arr = lm_head_weight
    if tv > v:
        weight_arr = jnp.pad(weight_arr, ((0, tv - v), (0, 0)))
    grid_n = n_pad // tn
    grid_v = pl.cdiv(weight_arr.shape[0], tv)
    v_span = grid_v * tv
    ragged_v = (v_span != v)

    kernel = functools.partial(_lm_head_loss_kernel,
                               v_total=v, tv=tv, ragged_v=ragged_v)

    # Weight is re-streamed once per N tile.
    bytes_accessed = (grid_n * weight_arr.size * w_bytes
                      + hidden_states.size * h_bytes
                      + labels2d.size * 4 + n_pad * 4)
    cost = pl.CostEstimate(flops=2 * n_pad * v_span * h,
                           transcendentals=n_pad * v_span,
                           bytes_accessed=int(bytes_accessed))

    footprint = _vmem_footprint(tn, tv, h, h_bytes, w_bytes)
    vmem_limit = int(min(int(0.92 * vmem_cap),
                         max(2 * footprint, 32 * 1024 * 1024)))

    def _build(single_buffer_resident):
        # hidden/labels blocks are j-invariant (resident across the whole V
        # sweep); single-buffering them halves their VMEM footprint for one
        # exposed DMA per N tile.
        kw = {"pipeline_mode": pl.Buffered(1)} if single_buffer_resident else {}
        in_specs = [
            pl.BlockSpec((tn, 1), lambda i, j: (i, 0), **kw),   # labels (TN, 1)
            pl.BlockSpec((tn, h), lambda i, j: (i, 0), **kw),   # hidden (TN, H), resident over V
            pl.BlockSpec((tv, h), lambda i, j: (j, 0)),         # weight (TV, H), streamed over V
        ]
        return pl.pallas_call(
            kernel,
            out_shape=jax.ShapeDtypeStruct((n_pad, 1), jnp.float32),
            grid_spec=pltpu.PrefetchScalarGridSpec(
                num_scalar_prefetch=0,
                grid=(grid_n, grid_v),
                in_specs=in_specs,
                out_specs=pl.BlockSpec((tn, 1), lambda i, j: (i, 0)),
                scratch_shapes=[pltpu.VMEM((tn, 1), jnp.float32),   # running max
                                pltpu.VMEM((tn, 1), jnp.float32),   # running expsum
                                pltpu.VMEM((tn, 1), jnp.float32)],  # running target logit
            ),
            compiler_params=pltpu.CompilerParams(
                dimension_semantics=("parallel", "arbitrary"),
                vmem_limit_bytes=vmem_limit),
            cost_estimate=cost,
        )

    try:
        per_row = _build(True)(labels2d, hidden_states, weight_arr)
    except Exception:
        # pl.Buffered(1) not supported by this jax/Mosaic build: fall back to the
        # default double-buffered pipeline (the VMEM budget already covers it).
        per_row = _build(False)(labels2d, hidden_states, weight_arr)

    # Padded rows carry label == IGNORE_INDEX -> contribute exactly 0.
    return jnp.sum(per_row)


def _reference_loss(hidden_states, labels, lm_head_weight):
    logits = jnp.dot(hidden_states, lm_head_weight.T,
                     preferred_element_type=jnp.float32)
    lse = jax.scipy.special.logsumexp(logits, axis=-1)
    safe = jnp.clip(labels, 0, None).astype(jnp.int32)
    tgt = jnp.take_along_axis(logits, safe[:, None], axis=-1)[:, 0]
    per_row = jnp.where(labels != IGNORE_INDEX, lse - tgt, 0.0)
    return jnp.sum(per_row)


if __name__ == "__main__":
    # Case 1: multi-tile grid (N tiles x V tiles), clean divisibility, bf16 inputs.
    N, H, V = 16, 128, 384
    k_h, k_w, k_l = jax.random.split(jax.random.PRNGKey(0), 3)
    hidden = jax.random.normal(k_h, (N, H), dtype=jnp.bfloat16)
    weight = (jax.random.normal(k_w, (V, H), dtype=jnp.bfloat16)
              * jnp.bfloat16(1.0 / (H ** 0.5)))
    labels = jax.random.randint(k_l, (N,), 0, V, dtype=jnp.int32)
    labels = labels.at[3].set(IGNORE_INDEX)          # exercise ignore_index

    loss = lm_head_loss(hidden, labels, weight, tn=8, tv=128)
    jax.block_until_ready(loss)
    ref = _reference_loss(hidden, labels, weight)
    assert jnp.allclose(loss, ref, rtol=5e-3, atol=1e-1), (loss, ref)

    # Case 2: N % tn != 0 (cheap row padding) and V % tv != 0 (ragged last V tile
    # handled with in-kernel masking, NO weight pad/copy).
    N2, H2, V2 = 12, 128, 200
    k_h2, k_w2, k_l2 = jax.random.split(jax.random.PRNGKey(1), 3)
    hidden2 = jax.random.normal(k_h2, (N2, H2), dtype=jnp.bfloat16)
    weight2 = (jax.random.normal(k_w2, (V2, H2), dtype=jnp.bfloat16)
               * jnp.bfloat16(1.0 / (H2 ** 0.5)))
    labels2 = jax.random.randint(k_l2, (N2,), 0, V2, dtype=jnp.int32)
    labels2 = labels2.at[0].set(IGNORE_INDEX)

    loss2 = lm_head_loss(hidden2, labels2, weight2, tn=8, tv=128)
    jax.block_until_ready(loss2)
    ref2 = _reference_loss(hidden2, labels2, weight2)
    assert jnp.allclose(loss2, ref2, rtol=5e-3, atol=1e-1), (loss2, ref2)

    # Case 3: automatic tile selection + vmem_limit derivation path (defaults).
    N3, H3, V3 = 40, 256, 512
    k_h3, k_w3, k_l3 = jax.random.split(jax.random.PRNGKey(2), 3)
    hidden3 = jax.random.normal(k_h3, (N3, H3), dtype=jnp.bfloat16)
    weight3 = (jax.random.normal(k_w3, (V3, H3), dtype=jnp.bfloat16)
               * jnp.bfloat16(1.0 / (H3 ** 0.5)))
    labels3 = jax.random.randint(k_l3, (N3,), 0, V3, dtype=jnp.int32)

    loss3 = lm_head_loss(hidden3, labels3, weight3)    # default tiles
    jax.block_until_ready(loss3)
    ref3 = _reference_loss(hidden3, labels3, weight3)
    assert jnp.allclose(loss3, ref3, rtol=5e-3, atol=1e-1), (loss3, ref3)

    print("KERNEL_OK")
</pallas_src>

<mosaic_0001>
module attributes {stable_mosaic.version = 11 : i64} {
  func.func @_lm_head_loss_kernel(%arg0: i32, %arg1: i32, %arg2: memref<8x1xi32, #tpu.memory_space<vmem>>, %arg3: memref<8x128xbf16, #tpu.memory_space<vmem>>, %arg4: memref<128x128xbf16, #tpu.memory_space<vmem>>, %arg5: memref<8x1xf32, #tpu.memory_space<vmem>>, %arg6: memref<8x1xf32, #tpu.memory_space<vmem>>, %arg7: memref<8x1xf32, #tpu.memory_space<vmem>>, %arg8: memref<8x1xf32, #tpu.memory_space<vmem>>) attributes {dimension_semantics = [#tpu.dimension_semantics<parallel>, #tpu.dimension_semantics<arbitrary>], iteration_bounds = array<i64: 2, 3>, scalar_prefetch = 0 : i64, scratch_operands = 3 : i64, tpu.core_type = #tpu.core_type<tc>, window_params = [{pipeline_mode = #tpu.pipeline_mode<synchronous>, transform_indices = @transform_0, window_bounds = array<i64: 8, 1>}, {pipeline_mode = #tpu.pipeline_mode<synchronous>, transform_indices = @transform_1, window_bounds = array<i64: 8, 128>}, {transform_indices = @transform_2, window_bounds = array<i64: 128, 128>}, {transform_indices = @transform_3, window_bounds = array<i64: 8, 1>}]} {
    %c0_i32 = arith.constant 0 : i32
    %0 = arith.cmpi eq, %arg1, %c0_i32 : i32
    %1 = arith.extui %0 : i1 to i32
    %c0_i32_0 = arith.constant 0 : i32
    %2 = arith.cmpi ne, %1, %c0_i32_0 : i32
    scf.if %2 {
      %cst_23 = arith.constant -1.000000e+30 : f32
      %40 = vector.broadcast %cst_23 : f32 to vector<8x1xf32>
      %c0_24 = arith.constant 0 : index
      %c0_25 = arith.constant 0 : index
      %41 = vector.load %arg6[%c0_24, %c0_25] : memref<8x1xf32, #tpu.memory_space<vmem>>, vector<8x1xf32>
      tpu.vector_store %arg6[%c0_24, %c0_25], %40 {strides = array<i32>} : memref<8x1xf32, #tpu.memory_space<vmem>>, vector<8x1xf32>,
      %cst_26 = arith.constant 0.000000e+00 : f32
      %42 = vector.broadcast %cst_26 : f32 to vector<8x1xf32>
      %c0_27 = arith.constant 0 : index
      %c0_28 = arith.constant 0 : index
      %43 = vector.load %arg7[%c0_27, %c0_28] : memref<8x1xf32, #tpu.memory_space<vmem>>, vector<8x1xf32>
      tpu.vector_store %arg7[%c0_27, %c0_28], %42 {strides = array<i32>} : memref<8x1xf32, #tpu.memory_space<vmem>>, vector<8x1xf32>,
      %cst_29 = arith.constant 0.000000e+00 : f32
      %44 = vector.broadcast %cst_29 : f32 to vector<8x1xf32>
      %c0_30 = arith.constant 0 : index
      %c0_31 = arith.constant 0 : index
      %45 = vector.load %arg8[%c0_30, %c0_31] : memref<8x1xf32, #tpu.memory_space<vmem>>, vector<8x1xf32>
      tpu.vector_store %arg8[%c0_30, %c0_31], %44 {strides = array<i32>} : memref<8x1xf32, #tpu.memory_space<vmem>>, vector<8x1xf32>,
    } else {
    }
    %c0 = arith.constant 0 : index
    %c0_1 = arith.constant 0 : index
    %3 = vector.load %arg3[%c0, %c0_1] : memref<8x128xbf16, #tpu.memory_space<vmem>>, vector<8x128xbf16>
    %c0_2 = arith.constant 0 : index
    %c0_3 = arith.constant 0 : index
    %4 = vector.load %arg4[%c0_2, %c0_3] : memref<128x128xbf16, #tpu.memory_space<vmem>>, vector<128x128xbf16>
    %cst = arith.constant dense<0.000000e+00> : vector<8x128xf32>
    %5 = tpu.matmul %3, %4, %cst {dimension_numbers = #tpu.dot_dimension_numbers<[1], [1], [0], [0], [0, 0, 1, 0], [], []>} : vector<8x128xbf16>, vector<128x128xbf16>, vector<8x128xf32> -> vector<8x128xf32>
    %6 = tpu.iota {dimensions = array<i32: 1>} : vector<1x128xi32>
    %c0_4 = arith.constant 0 : index
    %c0_5 = arith.constant 0 : index
    %7 = vector.load %arg2[%c0_4, %c0_5] : memref<8x1xi32, #tpu.memory_space<vmem>>, vector<8x1xi32>
    %c0_6 = arith.constant 0 : index
    %c0_7 = arith.constant 0 : index
    %8 = vector.load %arg8[%c0_6, %c0_7] : memref<8x1xf32, #tpu.memory_space<vmem>>, vector<8x1xf32>
    %c128_i32 = arith.constant 128 : i32
    %9 = arith.muli %arg1, %c128_i32 : i32
    %10 = vector.broadcast %9 : i32 to vector<8x1xi32>
    %11 = arith.subi %7, %10 : vector<8x1xi32>
    %12 = vector.broadcast %6 : vector<1x128xi32> to vector<8x128xi32>
    %13 = vector.broadcast %11 : vector<8x1xi32> to vector<8x128xi32>
    %14 = arith.cmpi eq, %12, %13 : vector<8x128xi32>
    %cst_8 = arith.constant 0.000000e+00 : f32
    %15 = vector.broadcast %cst_8 : f32 to vector<8x128xf32>
    %16 = arith.select %14, %5, %15 : vector<8x128xi1>, vector<8x128xf32>
    %cst_9 = arith.constant dense<0.000000e+00> : vector<8xf32>
    %17 = vector.multi_reduction <add>, %16, %cst_9 [1] : vector<8x128xf32> to vector<8xf32>
    %18 = vector.shape_cast %17 : vector<8xf32> to vector<8x1xf32>
    %19 = arith.addf %8, %18 : vector<8x1xf32>
    %c0_10 = arith.constant 0 : index
    %c0_11 = arith.constant 0 : index
    %20 = vector.load %arg8[%c0_10, %c0_11] : memref<8x1xf32, #tpu.memory_space<vmem>>, vector<8x1xf32>
    tpu.vector_store %arg8[%c0_10, %c0_11], %19 {strides = array<i32>} : memref<8x1xf32, #tpu.memory_space<vmem>>, vector<8x1xf32>,
    %c0_12 = arith.constant 0 : index
    %c0_13 = arith.constant 0 : index
    %21 = vector.load %arg6[%c0_12, %c0_13] : memref<8x1xf32, #tpu.memory_space<vmem>>, vector<8x1xf32>
    %cst_14 = arith.constant dense<0xFF800000> : vector<8xf32>
    %22 = vector.multi_reduction <maximumf>, %5, %cst_14 [1] : vector<8x128xf32> to vector<8xf32>
    %23 = vector.shape_cast %22 : vector<8xf32> to vector<8x1xf32>
    %24 = arith.maximumf %21, %23 : vector<8x1xf32>
    %c0_15 = arith.constant 0 : index
    %c0_16 = arith.constant 0 : index
    %25 = vector.load %arg7[%c0_15, %c0_16] : memref<8x1xf32, #tpu.memory_space<vmem>>, vector<8x1xf32>
    %26 = arith.subf %21, %24 : vector<8x1xf32>
    %27 = math.exp %26 : vector<8x1xf32>
    %28 = arith.mulf %25, %27 : vector<8x1xf32>
    %29 = vector.broadcast %24 : vector<8x1xf32> to vector<8x128xf32>
    %30 = arith.subf %5, %29 : vector<8x128xf32>
    %31 = math.exp %30 : vector<8x128xf32>
    %cst_17 = arith.constant dense<0.000000e+00> : vector<8xf32>
    %32 = vector.multi_reduction <add>, %31, %cst_17 [1] : vector<8x128xf32> to vector<8xf32>
    %33 = vector.shape_cast %32 : vector<8xf32> to vector<8x1xf32>
    %34 = arith.addf %28, %33 : vector<8x1xf32>
    %c0_18 = arith.constant 0 : index
    %c0_19 = arith.constant 0 : index
    %35 = vector.load %arg7[%c0_18, %c0_19] : memref<8x1xf32, #tpu.memory_space<vmem>>, vector<8x1xf32>
    tpu.vector_store %arg7[%c0_18, %c0_19], %34 {strides = array<i32>} : memref<8x1xf32, #tpu.memory_space<vmem>>, vector<8x1xf32>,
    %c0_20 = arith.constant 0 : index
    %c0_21 = arith.constant 0 : index
    %36 = vector.load %arg6[%c0_20, %c0_21] : memref<8x1xf32, #tpu.memory_space<vmem>>, vector<8x1xf32>
    tpu.vector_store %arg6[%c0_20, %c0_21], %24 {strides = array<i32>} : memref<8x1xf32, #tpu.memory_space<vmem>>, vector<8x1xf32>,
    %c2_i32 = arith.constant 2 : i32
    %37 = arith.cmpi eq, %arg1, %c2_i32 : i32
    %38 = arith.extui %37 : i1 to i32
    %c0_i32_22 = arith.constant 0 : i32
    %39 = arith.cmpi ne, %38, %c0_i32_22 : i32
    scf.if %39 {
      %c0_23 = arith.constant 0 : index
      %c0_24 = arith.constant 0 : index
      %40 = vector.load %arg6[%c0_23, %c0_24] : memref<8x1xf32, #tpu.memory_space<vmem>>, vector<8x1xf32>
      %c0_25 = arith.constant 0 : index
      %c0_26 = arith.constant 0 : index
      %41 = vector.load %arg7[%c0_25, %c0_26] : memref<8x1xf32, #tpu.memory_space<vmem>>, vector<8x1xf32>
      %42 = math.log %41 : vector<8x1xf32>
      %43 = arith.addf %40, %42 : vector<8x1xf32>
      %c-100_i32 = arith.constant -100 : i32
      %44 = vector.broadcast %c-100_i32 : i32 to vector<8x1xi32>
      %45 = arith.cmpi ne, %7, %44 : vector<8x1xi32>
      %c0_27 = arith.constant 0 : index
      %c0_28 = arith.constant 0 : index
      %46 = vector.load %arg8[%c0_27, %c0_28] : memref<8x1xf32, #tpu.memory_space<vmem>>, vector<8x1xf32>
      %47 = arith.subf %43, %46 : vector<8x1xf32>
      %cst_29 = arith.constant 0.000000e+00 : f32
      %48 = vector.broadcast %cst_29 : f32 to vector<8x1xf32>
      %49 = arith.select %45, %47, %48 : vector<8x1xi1>, vector<8x1xf32>
      %c0_30 = arith.constant 0 : index
      %c0_31 = arith.constant 0 : index
      %50 = vector.load %arg5[%c0_30, %c0_31] : memref<8x1xf32, #tpu.memory_space<vmem>>, vector<8x1xf32>
      tpu.vector_store %arg5[%c0_30, %c0_31], %49 {strides = array<i32>} : memref<8x1xf32, #tpu.memory_space<vmem>>, vector<8x1xf32>,
    } else {
    }
    return
  }
  func.func @transform_0(%arg0: i32, %arg1: i32) -> (i32, i32) {
    %c0_i32 = arith.constant 0 : i32
    %c0_i32_0 = arith.constant 0 : i32
    return %arg0, %c0_i32 : i32, i32
  }
  func.func @transform_1(%arg0: i32, %arg1: i32) -> (i32, i32) {
    %c0_i32 = arith.constant 0 : i32
    %c0_i32_0 = arith.constant 0 : i32
    return %arg0, %c0_i32 : i32, i32
  }
  func.func @transform_2(%arg0: i32, %arg1: i32) -> (i32, i32) {
    %c0_i32 = arith.constant 0 : i32
    %c0_i32_0 = arith.constant 0 : i32
    return %arg1, %c0_i32 : i32, i32
  }
  func.func @transform_3(%arg0: i32, %arg1: i32) -> (i32, i32) {
    %c0_i32 = arith.constant 0 : i32
    %c0_i32_0 = arith.constant 0 : i32
    return %arg0, %c0_i32 : i32, i32
  }
}

module attributes {stable_mosaic.version = 11 : i64} {
  func.func @_lm_head_loss_kernel(%arg0: i32, %arg1: i32, %arg2: memref<8x1xi32, #tpu.memory_space<vmem>>, %arg3: memref<8x128xbf16, #tpu.memory_space<vmem>>, %arg4: memref<128x128xbf16, #tpu.memory_space<vmem>>, %arg5: memref<8x1xf32, #tpu.memory_space<vmem>>, %arg6: memref<8x1xf32, #tpu.memory_space<vmem>>, %arg7: memref<8x1xf32, #tpu.memory_space<vmem>>, %arg8: memref<8x1xf32, #tpu.memory_space<vmem>>) attributes {dimension_semantics = [#tpu.dimension_semantics<parallel>, #tpu.dimension_semantics<arbitrary>], iteration_bounds = array<i64: 2, 3>, scalar_prefetch = 0 : i64, scratch_operands = 3 : i64, tpu.core_type = #tpu.core_type<tc>, window_params = [{transform_indices = @transform_0, window_bounds = array<i64: 8, 1>}, {transform_indices = @transform_1, window_bounds = array<i64: 8, 128>}, {transform_indices = @transform_2, window_bounds = array<i64: 128, 128>}, {transform_indices = @transform_3, window_bounds = array<i64: 8, 1>}]} {
    %c0_i32 = arith.constant 0 : i32
    %0 = arith.cmpi eq, %arg1, %c0_i32 : i32
    %1 = arith.extui %0 : i1 to i32
    %c0_i32_0 = arith.constant 0 : i32
    %2 = arith.cmpi ne, %1, %c0_i32_0 : i32
    scf.if %2 {
      %cst_23 = arith.constant -1.000000e+30 : f32
      %40 = vector.broadcast %cst_23 : f32 to vector<8x1xf32>
      %c0_24 = arith.constant 0 : index
      %c0_25 = arith.constant 0 : index
      %41 = vector.load %arg6[%c0_24, %c0_25] : memref<8x1xf32, #tpu.memory_space<vmem>>, vector<8x1xf32>
      tpu.vector_store %arg6[%c0_24, %c0_25], %40 {strides = array<i32>} : memref<8x1xf32, #tpu.memory_space<vmem>>, vector<8x1xf32>,
      %cst_26 = arith.constant 0.000000e+00 : f32
      %42 = vector.broadcast %cst_26 : f32 to vector<8x1xf32>
      %c0_27 = arith.constant 0 : index
      %c0_28 = arith.constant 0 : index
      %43 = vector.load %arg7[%c0_27, %c0_28] : memref<8x1xf32, #tpu.memory_space<vmem>>, vector<8x1xf32>
      tpu.vector_store %arg7[%c0_27, %c0_28], %42 {strides = array<i32>} : memref<8x1xf32, #tpu.memory_space<vmem>>, vector<8x1xf32>,
      %cst_29 = arith.constant 0.000000e+00 : f32
      %44 = vector.broadcast %cst_29 : f32 to vector<8x1xf32>
      %c0_30 = arith.constant 0 : index
      %c0_31 = arith.constant 0 : index
      %45 = vector.load %arg8[%c0_30, %c0_31] : memref<8x1xf32, #tpu.memory_space<vmem>>, vector<8x1xf32>
      tpu.vector_store %arg8[%c0_30, %c0_31], %44 {strides = array<i32>} : memref<8x1xf32, #tpu.memory_space<vmem>>, vector<8x1xf32>,
    } else {
    }
    %c0 = arith.constant 0 : index
    %c0_1 = arith.constant 0 : index
    %3 = vector.load %arg3[%c0, %c0_1] : memref<8x128xbf16, #tpu.memory_space<vmem>>, vector<8x128xbf16>
    %c0_2 = arith.constant 0 : index
    %c0_3 = arith.constant 0 : index
    %4 = vector.load %arg4[%c0_2, %c0_3] : memref<128x128xbf16, #tpu.memory_space<vmem>>, vector<128x128xbf16>
    %cst = arith.constant dense<0.000000e+00> : vector<8x128xf32>
    %5 = tpu.matmul %3, %4, %cst {dimension_numbers = #tpu.dot_dimension_numbers<[1], [1], [0], [0], [0, 0, 1, 0], [], []>} : vector<8x128xbf16>, vector<128x128xbf16>, vector<8x128xf32> -> vector<8x128xf32>
    %6 = tpu.iota {dimensions = array<i32: 1>} : vector<1x128xi32>
    %c0_4 = arith.constant 0 : index
    %c0_5 = arith.constant 0 : index
    %7 = vector.load %arg2[%c0_4, %c0_5] : memref<8x1xi32, #tpu.memory_space<vmem>>, vector<8x1xi32>
    %c0_6 = arith.constant 0 : index
    %c0_7 = arith.constant 0 : index
    %8 = vector.load %arg8[%c0_6, %c0_7] : memref<8x1xf32, #tpu.memory_space<vmem>>, vector<8x1xf32>
    %c128_i32 = arith.constant 128 : i32
    %9 = arith.muli %arg1, %c128_i32 : i32
    %10 = vector.broadcast %9 : i32 to vector<8x1xi32>
    %11 = arith.subi %7, %10 : vector<8x1xi32>
    %12 = vector.broadcast %6 : vector<1x128xi32> to vector<8x128xi32>
    %13 = vector.broadcast %11 : vector<8x1xi32> to vector<8x128xi32>
    %14 = arith.cmpi eq, %12, %13 : vector<8x128xi32>
    %cst_8 = arith.constant 0.000000e+00 : f32
    %15 = vector.broadcast %cst_8 : f32 to vector<8x128xf32>
    %16 = arith.select %14, %5, %15 : vector<8x128xi1>, vector<8x128xf32>
    %cst_9 = arith.constant dense<0.000000e+00> : vector<8xf32>
    %17 = vector.multi_reduction <add>, %16, %cst_9 [1] : vector<8x128xf32> to vector<8xf32>
    %18 = vector.shape_cast %17 : vector<8xf32> to vector<8x1xf32>
    %19 = arith.addf %8, %18 : vector<8x1xf32>
    %c0_10 = arith.constant 0 : index
    %c0_11 = arith.constant 0 : index
    %20 = vector.load %arg8[%c0_10, %c0_11] : memref<8x1xf32, #tpu.memory_space<vmem>>, vector<8x1xf32>
    tpu.vector_store %arg8[%c0_10, %c0_11], %19 {strides = array<i32>} : memref<8x1xf32, #tpu.memory_space<vmem>>, vector<8x1xf32>,
    %c0_12 = arith.constant 0 : index
    %c0_13 = arith.constant 0 : index
    %21 = vector.load %arg6[%c0_12, %c0_13] : memref<8x1xf32, #tpu.memory_space<vmem>>, vector<8x1xf32>
    %cst_14 = arith.constant dense<0xFF800000> : vector<8xf32>
    %22 = vector.multi_reduction <maximumf>, %5, %cst_14 [1] : vector<8x128xf32> to vector<8xf32>
    %23 = vector.shape_cast %22 : vector<8xf32> to vector<8x1xf32>
    %24 = arith.maximumf %21, %23 : vector<8x1xf32>
    %c0_15 = arith.constant 0 : index
    %c0_16 = arith.constant 0 : index
    %25 = vector.load %arg7[%c0_15, %c0_16] : memref<8x1xf32, #tpu.memory_space<vmem>>, vector<8x1xf32>
    %26 = arith.subf %21, %24 : vector<8x1xf32>
    %27 = math.exp %26 : vector<8x1xf32>
    %28 = arith.mulf %25, %27 : vector<8x1xf32>
    %29 = vector.broadcast %24 : vector<8x1xf32> to vector<8x128xf32>
    %30 = arith.subf %5, %29 : vector<8x128xf32>
    %31 = math.exp %30 : vector<8x128xf32>
    %cst_17 = arith.constant dense<0.000000e+00> : vector<8xf32>
    %32 = vector.multi_reduction <add>, %31, %cst_17 [1] : vector<8x128xf32> to vector<8xf32>
    %33 = vector.shape_cast %32 : vector<8xf32> to vector<8x1xf32>
    %34 = arith.addf %28, %33 : vector<8x1xf32>
    %c0_18 = arith.constant 0 : index
    %c0_19 = arith.constant 0 : index
    %35 = vector.load %arg7[%c0_18, %c0_19] : memref<8x1xf32, #tpu.memory_space<vmem>>, vector<8x1xf32>
    tpu.vector_store %arg7[%c0_18, %c0_19], %34 {strides = array<i32>} : memref<8x1xf32, #tpu.memory_space<vmem>>, vector<8x1xf32>,
    %c0_20 = arith.constant 0 : index
    %c0_21 = arith.constant 0 : index
    %36 = vector.load %arg6[%c0_20, %c0_21] : memref<8x1xf32, #tpu.memory_space<vmem>>, vector<8x1xf32>
    tpu.vector_store %arg6[%c0_20, %c0_21], %24 {strides = array<i32>} : memref<8x1xf32, #tpu.memory_space<vmem>>, vector<8x1xf32>,
    %c2_i32 = arith.constant 2 : i32
    %37 = arith.cmpi eq, %arg1, %c2_i32 : i32
    %38 = arith.extui %37 : i1 to i32
    %c0_i32_22 = arith.constant 0 : i32
    %39 = arith.cmpi ne, %38, %c0_i32_22 : i32
    scf.if %39 {
      %c0_23 = arith.constant 0 : index
      %c0_24 = arith.constant 0 : index
      %40 = vector.load %arg6[%c0_23, %c0_24] : memref<8x1xf32, #tpu.memory_space<vmem>>, vector<8x1xf32>
      %c0_25 = arith.constant 0 : index
      %c0_26 = arith.constant 0 : index
      %41 = vector.load %arg7[%c0_25, %c0_26] : memref<8x1xf32, #tpu.memory_space<vmem>>, vector<8x1xf32>
      %42 = math.log %41 : vector<8x1xf32>
      %43 = arith.addf %40, %42 : vector<8x1xf32>
      %c-100_i32 = arith.constant -100 : i32
      %44 = vector.broadcast %c-100_i32 : i32 to vector<8x1xi32>
      %45 = arith.cmpi ne, %7, %44 : vector<8x1xi32>
      %c0_27 = arith.constant 0 : index
      %c0_28 = arith.constant 0 : index
      %46 = vector.load %arg8[%c0_27, %c0_28] : memref<8x1xf32, #tpu.memory_space<vmem>>, vector<8x1xf32>
      %47 = arith.subf %43, %46 : vector<8x1xf32>
      %cst_29 = arith.constant 0.000000e+00 : f32
      %48 = vector.broadcast %cst_29 : f32 to vector<8x1xf32>
      %49 = arith.select %45, %47, %48 : vector<8x1xi1>, vector<8x1xf32>
      %c0_30 = arith.constant 0 : index
      %c0_31 = arith.constant 0 : index
      %50 = vector.load %arg5[%c0_30, %c0_31] : memref<8x1xf32, #tpu.memory_space<vmem>>, vector<8x1xf32>
      tpu.vector_store %arg5[%c0_30, %c0_31], %49 {strides = array<i32>} : memref<8x1xf32, #tpu.memory_space<vmem>>, vector<8x1xf32>,
    } else {
    }
    return
  }
  func.func @transform_0(%arg0: i32, %arg1: i32) -> (i32, i32) {
    %c0_i32 = arith.constant 0 : i32
    %c0_i32_0 = arith.constant 0 : i32
    return %arg0, %c0_i32 : i32, i32
  }
  func.func @transform_1(%arg0: i32, %arg1: i32) -> (i32, i32) {
    %c0_i32 = arith.constant 0 : i32
    %c0_i32_0 = arith.constant 0 : i32
    return %arg0, %c0_i32 : i32, i32
  }
  func.func @transform_2(%arg0: i32, %arg1: i32) -> (i32, i32) {
    %c0_i32 = arith.constant 0 : i32
    %c0_i32_0 = arith.constant 0 : i32
    return %arg1, %c0_i32 : i32, i32
  }
  func.func @transform_3(%arg0: i32, %arg1: i32) -> (i32, i32) {
    %c0_i32 = arith.constant 0 : i32
    %c0_i32_0 = arith.constant 0 : i32
    return %arg0, %c0_i32 : i32, i32
  }
}

</mosaic_0001>

<llo_original>
// kernel: tpu_custom_call.1
$region0: #{tpu_custom_call.1}
  #allocation0 [shape = 'u32[]', space=smem, size = 0x4, offset = 0x4, fixed_abs, tag = 'smem constant byte address 0x4 - core index']
  #allocation1 [shape = 'u32[72,128]{1,0:T(1,128)}', space=vmem, size = 0x9000, scoped, tag = 'internal scratch']
  #allocation2 [shape = 'f32[8,1]{1,0:T(8,128)}', space=vmem, size = 0x1000, scoped, tag = 'scratch operand']
  #allocation3 [shape = 'f32[8,1]{1,0:T(8,128)}', space=vmem, size = 0x1000, scoped, tag = 'scratch operand']
  #allocation4 [shape = 'f32[8,1]{1,0:T(8,128)}', space=vmem, size = 0x1000, scoped, tag = 'scratch operand']
  %s0 = inlined_call_operand.vmem [shape: s32[16,1], index: 0, kind: input, shape index: {}]
  %s1 = inlined_call_operand.vmem [shape: bf16[16,128], index: 1, kind: input, shape index: {}]
  %s2 = inlined_call_operand.hbm [shape: bf16[384,128], index: 2, kind: input, shape index: {}]
  %s3 = inlined_call_operand.vmem [shape: f32[16,1], index: 3, kind: output, shape index: {}]
  %s4 = sld [smem:[#allocation0]]
  $region57: #{tpu_custom_call.1} parent=0
    _
  %s6 = ssub.s32 1, %s4
  %s7 = scalar_select 0, %s6, %s4
  $region1: #{tpu_custom_call.1} parent=0
    #allocation5 [shape = 'u8[65536]{0}', space=vmem, size = 0x10000, scoped, tag = 'input window, operand 2']
    #allocation6 [shape = 's32[2]{0}', space=sflag, size = 0x8, scoped, tag = 'scoped memory for tpu_custom_call.1']
    %8 = vsyncpa [#allocation6], 0
    %s9 = scalar_lea.sflag [#allocation6], 1
    %10 = vsyncpa %s9, 0
    loop: start=0, step=1, limit=8
    $region2: #{tpu_custom_call.1} parent=1 // loop_pre_header
      _
    $region3: #{tpu_custom_call.1} parent=1 // loop_header
      %s12 = sphi 0, %s16
      %p13 = scmp.ge.s32.totalorder %s12, 8
      %s19 = sphi 0, %s31
      %s20 = sphi 0, %s27
      %s21 = sphi 0, %s19
      %s22 = sphi 0, %s20
      %s23 = sphi 0, %s21
      %s24 = sphi 0, %s22
      %s34 = sphi 0, %s36
      %s37 = sphi 0, %s34
      %s38 = sphi 0, %s37
      %s54 = sphi 0, %s38
      %s60 = sphi 0, %s62
      %s63 = sphi 0, %s60
      %s64 = sphi 0, %s63
      %s80 = sphi 0, %s64
      %s86 = sphi 0, %s88
      %s89 = sphi 0, %s86
      %s90 = sphi 0, %s89
      %s106 = sphi 0, %s90
      %s112 = sphi 0, %s114
      %s115 = sphi 0, %s112
      %s116 = sphi 0, %s115
      %s132 = sphi 0, %s116
    $region4: #{tpu_custom_call.1} parent=1 // loop_header_branch
      %15 = sbr.rel (%p13) target = $region8
    $region5: #{tpu_custom_call.1} parent=1 // loop_body
      %s17 = ssub.s32 %s12, 1
      %s18 = ssub.s32 %s12, 2
      %s25 = sadd.s32 1, %s20
      %p26 = scmp.ge.s32.totalorder %s25, 3
      %s27 = scalar_select %p26, 0, %s25
      %s28 = sadd.s32 1, %s19
      %s29 = scalar_select %p26, %s28, %s19
      %p30 = scmp.ge.s32.totalorder %s29, 2
      %s31 = scalar_select %p30, 0, %s29
      %s32 = ssub.s32 %s19, %s31
      %p33 = scmp.eq.s32.totalorder %s32, 0
      %s35 = sadd.s32 %s34, 1
      %s36 = scalar_select %p33, %s34, %s35
      %p39 = pneg %p33
      %p40 = scmp.eq.s32.totalorder %s12, 5
      %p41 = por %p39, %p40
      %p42 = scmp.ne.s32.totalorder %s34, %s37
      %p43 = scmp.eq.s32.totalorder %s12, 0
      %p44 = por %p42, %p43
      %p45 = scmp.ne.s32.totalorder %s34, %s37
      %p46 = scmp.eq.s32.totalorder %s17, 5
      %p47 = por %p45, %p46
      %p48 = scmp.ne.s32.totalorder %s37, %s38
      %p49 = scmp.eq.s32.totalorder %s17, 0
      %p50 = por %p48, %p49
      %p51 = scmp.ne.s32.totalorder %s37, %s38
      %p52 = scmp.eq.s32.totalorder %s18, 5
      %p53 = por %p51, %p52
      %p55 = scmp.ne.s32.totalorder %s38, %s54
      %p56 = scmp.eq.s32.totalorder %s18, 0
      %p57 = por %p55, %p56
      %s58 = ssub.s32 %s19, %s31
      %p59 = scmp.eq.s32.totalorder %s58, 0
      %s61 = sadd.s32 %s60, 1
      %s62 = scalar_select %p59, %s60, %s61
      %p65 = pneg %p59
      %p66 = scmp.eq.s32.totalorder %s12, 5
      %p67 = por %p65, %p66
      %p68 = scmp.ne.s32.totalorder %s60, %s63
      %p69 = scmp.eq.s32.totalorder %s12, 0
      %p70 = por %p68, %p69
      %p71 = scmp.ne.s32.totalorder %s60, %s63
      %p72 = scmp.eq.s32.totalorder %s17, 5
      %p73 = por %p71, %p72
      %p74 = scmp.ne.s32.totalorder %s63, %s64
      %p75 = scmp.eq.s32.totalorder %s17, 0
      %p76 = por %p74, %p75
      %p77 = scmp.ne.s32.totalorder %s63, %s64
      %p78 = scmp.eq.s32.totalorder %s18, 5
      %p79 = por %p77, %p78
      %p81 = scmp.ne.s32.totalorder %s64, %s80
      %p82 = scmp.eq.s32.totalorder %s18, 0
      %p83 = por %p81, %p82
      %s84 = ssub.s32 %s20, %s27
      %p85 = scmp.eq.s32.totalorder %s84, 0
      %s87 = sadd.s32 %s86, 1
      %s88 = scalar_select %p85, %s86, %s87
      %p91 = pneg %p85
      %p92 = scmp.eq.s32.totalorder %s12, 5
      %p93 = por %p91, %p92
      %p94 = scmp.ne.s32.totalorder %s86, %s89
      %p95 = scmp.eq.s32.totalorder %s12, 0
      %p96 = por %p94, %p95
      %p97 = scmp.ne.s32.totalorder %s86, %s89
      %p98 = scmp.eq.s32.totalorder %s17, 5
      %p99 = por %p97, %p98
      %p100 = scmp.ne.s32.totalorder %s89, %s90
      %p101 = scmp.eq.s32.totalorder %s17, 0
      %p102 = por %p100, %p101
      %p103 = scmp.ne.s32.totalorder %s89, %s90
      %p104 = scmp.eq.s32.totalorder %s18, 5
      %p105 = por %p103, %p104
      %p107 = scmp.ne.s32.totalorder %s90, %s106
      %p108 = scmp.eq.s32.totalorder %s18, 0
      %p109 = por %p107, %p108
      %s110 = ssub.s32 %s19, %s31
      %p111 = scmp.eq.s32.totalorder %s110, 0
      %s113 = sadd.s32 %s112, 1
      %s114 = scalar_select %p111, %s112, %s113
      %p117 = pneg %p111
      %p118 = scmp.eq.s32.totalorder %s12, 5
      %p119 = por %p117, %p118
      %p120 = scmp.ne.s32.totalorder %s112, %s115
      %p121 = scmp.eq.s32.totalorder %s12, 0
      %p122 = por %p120, %p121
      %p123 = scmp.ne.s32.totalorder %s112, %s115
      %p124 = scmp.eq.s32.totalorder %s17, 5
      %p125 = por %p123, %p124
      %p126 = scmp.ne.s32.totalorder %s115, %s116
      %p127 = scmp.eq.s32.totalorder %s17, 0
      %p128 = por %p126, %p127
      %p129 = scmp.ne.s32.totalorder %s115, %s116
      %p130 = scmp.eq.s32.totalorder %s18, 5
      %p131 = por %p129, %p130
      %p133 = scmp.ne.s32.totalorder %s116, %s132
      %p134 = scmp.eq.s32.totalorder %s18, 0
      %p135 = por %p133, %p134
      %p136 = scmp.le.s32.totalorder 1, %s12
      %p137 = scmp.lt.s32.totalorder %s12, 7
      %p138 = pnand %p136, %p137
      %p139 = pneg %p138
      // Predicated region
      $region9: #{tpu_custom_call.1} parent=5 // pred_check
        _
      $region10: #{tpu_custom_call.1} parent=5 // pred_check_branch
        %141 = sbr.rel (%p138) target = $region12
      $region11: #{tpu_custom_call.1} parent=5 // pred_region
        %s142 = ssub.s32 %s12, 1
        // Predicated region
        $region13: #{tpu_custom_call.1} parent=11 // pred_check
          %p143 = pneg %p50
        $region14: #{tpu_custom_call.1} parent=11 // pred_check_branch
          %145 = sbr.rel (%p143) target = $region16
        $region15: #{tpu_custom_call.1} parent=11 // pred_region
          %p146 = scmp.lt.s32.totalorder %s21, 1
          %s147 = scalar_select %p146, %s21, 1
          %s148 = smul.addr %s147, 8
          %s149 = scalar_lea.vmem %s0, %s148
        $region16: #{tpu_custom_call.1} parent=11 // pred_fallthru
          _
        // Predicated region
        $region17: #{tpu_custom_call.1} parent=11 // pred_check
          %p150 = pneg %p76
        $region18: #{tpu_custom_call.1} parent=11 // pred_check_branch
          %152 = sbr.rel (%p150) target = $region20
        $region19: #{tpu_custom_call.1} parent=11 // pred_region
          %p153 = scmp.lt.s32.totalorder %s21, 1
          %s154 = scalar_select %p153, %s21, 1
          %s155 = smul.addr %s154, 4
          %s156 = scalar_lea.vmem %s1, %s155
        $region20: #{tpu_custom_call.1} parent=11 // pred_fallthru
          _
      $region12: #{tpu_custom_call.1} parent=5 // pred_fallthru
        _
      %p157 = scmp.lt.s32.totalorder %s12, 6
      // Predicated region
      $region21: #{tpu_custom_call.1} parent=5 // pred_check
        %p158 = pneg %p157
      $region22: #{tpu_custom_call.1} parent=5 // pred_check_branch
        %160 = sbr.rel (%p158) target = $region24
      $region23: #{tpu_custom_call.1} parent=5 // pred_region
        // Predicated region
        $region25: #{tpu_custom_call.1} parent=23 // pred_check
          %p161 = pneg %p96
        $region26: #{tpu_custom_call.1} parent=23 // pred_check_branch
          %163 = sbr.rel (%p161) target = $region28
        $region27: #{tpu_custom_call.1} parent=23 // pred_region
          %s164 = sand.u32 %s86, 1
          %s165 = scalar_lea.sflag [#allocation6], %s164
          %s166 = sand.u32 %s86, 1
          %s167 = smul.addr %s166, 64
          %s168 = scalar_lea.vmem [#allocation5], %s167
          %s169 = smul.u32 16, %s20
          %171 = vsyncadd %s165, 0
          %s172 = smul.addr %s169, 4
          %s173 = scalar_lea.hbm %s2, %s172
          %s174 = sshll.u32 %s173, 4
          %s175 = int_to_ptr.hbm [resolvable:$true] %s174
          %s176 = sshll.u32 %s168, 4
          %s177 = int_to_ptr.vmem [resolvable:$true] %s176
          %182 = dma.hbm_to_vmem [thread:$0]  %s175, 1024, %s177, %s165, 64, 64, 4
        $region28: #{tpu_custom_call.1} parent=23 // pred_fallthru
          _
      $region24: #{tpu_custom_call.1} parent=5 // pred_fallthru
        _
      %p183 = scmp.le.s32.totalorder 1, %s12
      %p184 = scmp.lt.s32.totalorder %s12, 7
      %p185 = pnand %p183, %p184
      %p186 = pneg %p185
      // Predicated region
      $region29: #{tpu_custom_call.1} parent=5 // pred_check
        _
      $region30: #{tpu_custom_call.1} parent=5 // pred_check_branch
        %188 = sbr.rel (%p185) target = $region32
      $region31: #{tpu_custom_call.1} parent=5 // pred_region
        %s189 = ssub.s32 %s12, 1
        %s190 = sand.u32 %s89, 1
        %s191 = scalar_lea.sflag [#allocation6], %s190
        %s192 = sand.u32 %s89, 1
        %s193 = smul.addr %s192, 64
        %s194 = scalar_lea.vmem [#allocation5], %s193
        // Predicated region
        $region33: #{tpu_custom_call.1} parent=31 // pred_check
          %p195 = pneg %p102
        $region34: #{tpu_custom_call.1} parent=31 // pred_check_branch
          %197 = sbr.rel (%p195) target = $region36
        $region35: #{tpu_custom_call.1} parent=31 // pred_region
          %199 = dma.done %s191, 1024
        $region36: #{tpu_custom_call.1} parent=31 // pred_fallthru
          _
        %p200 = scmp.lt.s32.totalorder %s21, 1
        %s201 = scalar_select %p200, %s21, 1
        %s202 = smul.addr %s201, 8
        %s203 = scalar_lea.vmem %s0, %s202
        %p204 = pneg %p50
        %p205 = pneg %p47
        %p206 = scmp.lt.s32.totalorder %s21, 1
        %s207 = scalar_select %p206, %s21, 1
        %s208 = smul.addr %s207, 4
        %s209 = scalar_lea.vmem %s1, %s208
        %p210 = pneg %p76
        %p211 = pneg %p73
        %s212 = sand.u32 %s89, 1
        %s213 = scalar_lea.sflag [#allocation6], %s212
        %s214 = sand.u32 %s89, 1
        %s215 = smul.addr %s214, 64
        %s216 = scalar_lea.vmem [#allocation5], %s215
        %p217 = pneg %p102
        %p218 = pneg %p99
        %p219 = pneg %p128
        %p220 = pneg %p125
        %p221 = scmp.lt.s32.totalorder %s21, 1
        %s222 = scalar_select %p221, %s21, 1
        %s223 = smul.addr %s222, 8
        %s224 = scalar_lea.vmem %s3, %s223
        %p225 = scmp.lt.s32.totalorder %s21, 1
        %s226 = scalar_select %p225, %s21, 1
        %s227 = smul.addr %s226, 8
        %s228 = scalar_lea.vmem %s0, %s227
        %p229 = scmp.lt.s32.totalorder %s21, 1
        %s230 = scalar_select %p229, %s21, 1
        %s231 = smul.addr %s230, 4
        %s232 = scalar_lea.vmem %s1, %s231
        %s233 = smul.u32 16, %s22
        %p234 = scmp.lt.s32.totalorder %s21, 1
        %s235 = scalar_select %p234, %s21, 1
        %s236 = smul.addr %s235, 8
        %s237 = scalar_lea.vmem %s3, %s236
        %p238 = scmp.eq.s32.totalorder %s22, 0
        // Predicated region
        $region37: #{tpu_custom_call.1} parent=31 // pred_check
          %p239 = pneg %p238
        $region38: #{tpu_custom_call.1} parent=31 // pred_check_branch
          %241 = sbr.rel (%p239) target = $region40
        $region39: #{tpu_custom_call.1} parent=31 // pred_region
          %vm242 = vcmask 7168
          %243 = vst.msk [vmem:[#allocation2] sm:$0xff] %vm242, -1e+30
          %244 = vst.msk [vmem:[#allocation3] sm:$0xff] %vm242, 0.0
          %245 = vst.msk [vmem:[#allocation4] sm:$0xff] %vm242, 0.0
        $region40: #{tpu_custom_call.1} parent=31 // pred_fallthru
          _
        %v246 = vld [vmem:[%s232] sm:$0xf]
        %v247 = vld [vmem:[%s194] sm:$0xf]
        %v248 = vld [vmem:[%s194 + $0x4] sm:$0xf]
        %v249 = vld [vmem:[%s194 + $0x8] sm:$0xf]
        %v250 = vld [vmem:[%s194 + $0xc] sm:$0xf]
        %v251 = vld [vmem:[%s194 + $0x10] sm:$0xf]
        %v252 = vld [vmem:[%s194 + $0x14] sm:$0xf]
        %v253 = vld [vmem:[%s194 + $0x18] sm:$0xf]
        %v254 = vld [vmem:[%s194 + $0x1c] sm:$0xf]
        %v255 = vld [vmem:[%s194 + $0x20] sm:$0xf]
        %v256 = vld [vmem:[%s194 + $0x24] sm:$0xf]
        %v257 = vld [vmem:[%s194 + $0x28] sm:$0xf]
        %v258 = vld [vmem:[%s194 + $0x2c] sm:$0xf]
        %v259 = vld [vmem:[%s194 + $0x30] sm:$0xf]
        %v260 = vld [vmem:[%s194 + $0x34] sm:$0xf]
        %v261 = vld [vmem:[%s194 + $0x38] sm:$0xf]
        %v262 = vld [vmem:[%s194 + $0x3c] sm:$0xf]
        %v279 = vunpack.c.l.b16 %v247
        %v280 = vunpack.c.l.b16 %v248
        %v281 = vunpack.c.l.b16 %v249
        %v282 = vunpack.c.l.b16 %v250
        %v283 = vunpack.c.l.b16 %v251
        %v284 = vunpack.c.l.b16 %v252
        %v285 = vunpack.c.l.b16 %v253
        %v286 = vunpack.c.l.b16 %v254
        %v287 = vunpack.c.l.b16 %v255
        %v288 = vunpack.c.l.b16 %v256
        %v289 = vunpack.c.l.b16 %v257
        %v290 = vunpack.c.l.b16 %v258
        %v291 = vunpack.c.l.b16 %v259
        %v292 = vunpack.c.l.b16 %v260
        %v293 = vunpack.c.l.b16 %v261
        %v294 = vunpack.c.l.b16 %v262
        %v295 = vpack.c.b16 %v280, %v279
        %v296 = vpack.c.b16 %v282, %v281
        %v297 = vpack.c.b16 %v284, %v283
        %v298 = vpack.c.b16 %v286, %v285
        %v299 = vpack.c.b16 %v288, %v287
        %v300 = vpack.c.b16 %v290, %v289
        %v301 = vpack.c.b16 %v292, %v291
        %v302 = vpack.c.b16 %v294, %v293
        %311 = vmatpush.bf16.xpose.msra.mxu0 %v302
        %312 = vmatpush.bf16.xpose.msra.mxu0 %v301
        %313 = vmatpush.bf16.xpose.msra.mxu0 %v300
        %314 = vmatpush.bf16.xpose.msra.mxu0 %v299
        %315 = vmatpush.bf16.xpose.msra.mxu0 %v298
        %316 = vmatpush.bf16.xpose.msra.mxu0 %v297
        %317 = vmatpush.bf16.xpose.msra.mxu0 %v296
        %318 = vmatpush.bf16.xpose.msra.mxu0 %v295
        %319 = vmatmul.bf16.gmra.mxu0 %v246
        %v320 = vpop.f32.mrf.mxu0
        %v321 = vadd.f32 0.0, %v320
        %v322 = vpop.f32.mrf.mxu0
        %323 = vdwg.mxu0
        %v324 = vlaneseq
        %v325 = vand.u32 %v324, 127
        %v326 = vld [vmem:[%s228] sm:$0xff]
        %v327 = vld [vmem:[#allocation4] sm:$0xff]
        %s328 = smul.u32 %s22, 128
        %v329 = vstv %s328
        %v330 = vsub.s32 %v326, %v329
        %331 = vset.pattern.permute.xlu0 0
        %332 = vperm.xlu0 %331, %v330
        %v333 = vpop.permute.xlu0 %332
        %vm334 = vcmp.eq.s32.totalorder %v325, %v333
        %v335 = vsel %vm334, %v321, 0.0
        %336 = vadd.xlane.f32.xlu0 %v335
        %v337 = vpop.xlane.xlu0 %336
        %v338 = vadd.f32 %v327, %v337
        %vm339 = vcmask 7168
        %340 = vst.msk [vmem:[#allocation4] sm:$0xff] %vm339, %v338
        %v341 = vld [vmem:[#allocation2] sm:$0xff]
        %342 = vmax.xlane.f32.xlu0 %v321
        %v343 = vpop.xlane.xlu0 %342
        %v344 = vmax.f32 %v341, %v343
        %v345 = vld [vmem:[#allocation3] sm:$0xff]
        %v346 = vsub.f32 %v341, %v344
        %v347 = vmul.f32 %v346, 1.442695
        %v348 = vpow.pop %v347
        %v349 = vmul.f32 %v345, %v348
        %351 = vset.pattern.permute.xlu0 0
        %352 = vperm.xlu0 %351, %v344
        %v353 = vpop.permute.xlu0 %352
        %v355 = vsub.f32 %v321, %v353
        %v356 = vmul.f32 %v355, 1.442695
        %v357 = vpow.pop %v356
        %358 = vadd.xlane.f32.xlu0 %v357
        %v359 = vpop.xlane.xlu0 %358
        %v360 = vadd.f32 %v349, %v359
        %361 = vst.msk [vmem:[#allocation3] sm:$0xff] %vm339, %v360
        %362 = vst.msk [vmem:[#allocation2] sm:$0xff] %vm339, %v344
        %p363 = scmp.eq.s32.totalorder %s22, 2
        // Predicated region
        $region41: #{tpu_custom_call.1} parent=31 // pred_check
          %p364 = pneg %p363
        $region42: #{tpu_custom_call.1} parent=31 // pred_check_branch
          %366 = sbr.rel (%p364) target = $region44
        $region43: #{tpu_custom_call.1} parent=31 // pred_region
          %v367 = vld [vmem:[#allocation2] sm:$0xff]
          %v368 = vld [vmem:[#allocation3] sm:$0xff]
          %v369 = vlog2.pop %v368
          %v370 = vmul.f32 %v369, 0.6931472
          %v371 = vadd.f32 %v367, %v370
          %vm372 = vcmp.ne.s32.totalorder %v326, 4294967196
          %v373 = vld [vmem:[#allocation4] sm:$0xff]
          %v374 = vsub.f32 %v371, %v373
          %v375 = vsel %vm372, %v374, 0.0
          %376 = vst.msk [vmem:[%s237] sm:$0xff] %vm339, %v375
        $region44: #{tpu_custom_call.1} parent=31 // pred_fallthru
          _
        %p377 = scmp.lt.s32.totalorder %s21, 1
        %s378 = scalar_select %p377, %s21, 1
        %s379 = smul.addr %s378, 8
        %s380 = scalar_lea.vmem %s3, %s379
        // Predicated region
        $region45: #{tpu_custom_call.1} parent=31 // pred_check
          %p381 = pneg %p125
        $region46: #{tpu_custom_call.1} parent=31 // pred_check_branch
          %383 = sbr.rel (%p381) target = $region48
        $region47: #{tpu_custom_call.1} parent=31 // pred_region
          _
        $region48: #{tpu_custom_call.1} parent=31 // pred_fallthru
          _
      $region32: #{tpu_custom_call.1} parent=5 // pred_fallthru
        _
      %p384 = scmp.le.s32.totalorder 2, %s12
      // Predicated region
      $region49: #{tpu_custom_call.1} parent=5 // pred_check
        %p385 = pneg %p384
      $region50: #{tpu_custom_call.1} parent=5 // pred_check_branch
        %387 = sbr.rel (%p385) target = $region52
      $region51: #{tpu_custom_call.1} parent=5 // pred_region
        %s388 = ssub.s32 %s12, 2
        // Predicated region
        $region53: #{tpu_custom_call.1} parent=51 // pred_check
          %p389 = pneg %p131
        $region54: #{tpu_custom_call.1} parent=51 // pred_check_branch
          %391 = sbr.rel (%p389) target = $region56
        $region55: #{tpu_custom_call.1} parent=51 // pred_region
          %p392 = scmp.lt.s32.totalorder %s23, 1
          %s393 = scalar_select %p392, %s23, 1
          %s394 = smul.addr %s393, 8
          %s395 = scalar_lea.vmem %s3, %s394
        $region56: #{tpu_custom_call.1} parent=51 // pred_fallthru
          _
      $region52: #{tpu_custom_call.1} parent=5 // pred_fallthru
        _
    $region6: #{tpu_custom_call.1} parent=1 // loop_footer
      %s16 = sadd.s32 1, %s12
    $region7: #{tpu_custom_call.1} parent=1 // loop_footer_branch
      %11 = sbr.rel target = $region3
    $region8: #{tpu_custom_call.1} parent=1 // loop_exit
      _
    %396 = vsyncpa [#allocation6], 1
    %s397 = scalar_lea.sflag [#allocation6], 1
    %398 = vsyncpa %s397, 1

// kernel: tpu_custom_call.1
$region0: #{tpu_custom_call.1}
  #allocation0 [shape = 'u32[]', space=smem, size = 0x4, offset = 0x4, fixed_abs, tag = 'smem constant byte address 0x4 - core index']
  #allocation1 [shape = 'u32[72,128]{1,0:T(1,128)}', space=vmem, size = 0x9000, scoped, tag = 'internal scratch']
  #allocation2 [shape = 'f32[8,1]{1,0:T(8,128)}', space=vmem, size = 0x1000, scoped, tag = 'scratch operand']
  #allocation3 [shape = 'f32[8,1]{1,0:T(8,128)}', space=vmem, size = 0x1000, scoped, tag = 'scratch operand']
  #allocation4 [shape = 'f32[8,1]{1,0:T(8,128)}', space=vmem, size = 0x1000, scoped, tag = 'scratch operand']
  %s0 = inlined_call_operand.vmem [shape: s32[16,1], index: 0, kind: input, shape index: {}]
  %s1 = inlined_call_operand.vmem [shape: bf16[16,128], index: 1, kind: input, shape index: {}]
  %s2 = inlined_call_operand.hbm [shape: bf16[384,128], index: 2, kind: input, shape index: {}]
  %s3 = inlined_call_operand.vmem [shape: f32[16,1], index: 3, kind: output, shape index: {}]
  %s4 = sld [smem:[#allocation0]]
  $region57: #{tpu_custom_call.1} parent=0
    _
  %s6 = ssub.s32 1, %s4
  %s7 = scalar_select 0, %s6, %s4
  $region1: #{tpu_custom_call.1} parent=0
    #allocation5 [shape = 'u8[65536]{0}', space=vmem, size = 0x10000, scoped, tag = 'input window, operand 2']
    #allocation6 [shape = 's32[2]{0}', space=sflag, size = 0x8, scoped, tag = 'scoped memory for tpu_custom_call.1']
    %8 = vsyncpa [#allocation6], 0
    %s9 = scalar_lea.sflag [#allocation6], 1
    %10 = vsyncpa %s9, 0
    loop: start=0, step=1, limit=8
    $region2: #{tpu_custom_call.1} parent=1 // loop_pre_header
      _
    $region3: #{tpu_custom_call.1} parent=1 // loop_header
      %s12 = sphi 0, %s16
      %p13 = scmp.ge.s32.totalorder %s12, 8
      %s19 = sphi 0, %s31
      %s20 = sphi 0, %s27
      %s21 = sphi 0, %s19
      %s22 = sphi 0, %s20
      %s23 = sphi 0, %s21
      %s24 = sphi 0, %s22
      %s34 = sphi 0, %s36
      %s37 = sphi 0, %s34
      %s38 = sphi 0, %s37
      %s54 = sphi 0, %s38
      %s60 = sphi 0, %s62
      %s63 = sphi 0, %s60
      %s64 = sphi 0, %s63
      %s80 = sphi 0, %s64
      %s86 = sphi 0, %s88
      %s89 = sphi 0, %s86
      %s90 = sphi 0, %s89
      %s106 = sphi 0, %s90
      %s112 = sphi 0, %s114
      %s115 = sphi 0, %s112
      %s116 = sphi 0, %s115
      %s132 = sphi 0, %s116
    $region4: #{tpu_custom_call.1} parent=1 // loop_header_branch
      %15 = sbr.rel (%p13) target = $region8
    $region5: #{tpu_custom_call.1} parent=1 // loop_body
      %s17 = ssub.s32 %s12, 1
      %s18 = ssub.s32 %s12, 2
      %s25 = sadd.s32 1, %s20
      %p26 = scmp.ge.s32.totalorder %s25, 3
      %s27 = scalar_select %p26, 0, %s25
      %s28 = sadd.s32 1, %s19
      %s29 = scalar_select %p26, %s28, %s19
      %p30 = scmp.ge.s32.totalorder %s29, 2
      %s31 = scalar_select %p30, 0, %s29
      %s32 = ssub.s32 %s19, %s31
      %p33 = scmp.eq.s32.totalorder %s32, 0
      %s35 = sadd.s32 %s34, 1
      %s36 = scalar_select %p33, %s34, %s35
      %p39 = pneg %p33
      %p40 = scmp.eq.s32.totalorder %s12, 5
      %p41 = por %p39, %p40
      %p42 = scmp.ne.s32.totalorder %s34, %s37
      %p43 = scmp.eq.s32.totalorder %s12, 0
      %p44 = por %p42, %p43
      %p45 = scmp.ne.s32.totalorder %s34, %s37
      %p46 = scmp.eq.s32.totalorder %s17, 5
      %p47 = por %p45, %p46
      %p48 = scmp.ne.s32.totalorder %s37, %s38
      %p49 = scmp.eq.s32.totalorder %s17, 0
      %p50 = por %p48, %p49
      %p51 = scmp.ne.s32.totalorder %s37, %s38
      %p52 = scmp.eq.s32.totalorder %s18, 5
      %p53 = por %p51, %p52
      %p55 = scmp.ne.s32.totalorder %s38, %s54
      %p56 = scmp.eq.s32.totalorder %s18, 0
      %p57 = por %p55, %p56
      %s58 = ssub.s32 %s19, %s31
      %p59 = scmp.eq.s32.totalorder %s58, 0
      %s61 = sadd.s32 %s60, 1
      %s62 = scalar_select %p59, %s60, %s61
      %p65 = pneg %p59
      %p66 = scmp.eq.s32.totalorder %s12, 5
      %p67 = por %p65, %p66
      %p68 = scmp.ne.s32.totalorder %s60, %s63
      %p69 = scmp.eq.s32.totalorder %s12, 0
      %p70 = por %p68, %p69
      %p71 = scmp.ne.s32.totalorder %s60, %s63
      %p72 = scmp.eq.s32.totalorder %s17, 5
      %p73 = por %p71, %p72
      %p74 = scmp.ne.s32.totalorder %s63, %s64
      %p75 = scmp.eq.s32.totalorder %s17, 0
      %p76 = por %p74, %p75
      %p77 = scmp.ne.s32.totalorder %s63, %s64
      %p78 = scmp.eq.s32.totalorder %s18, 5
      %p79 = por %p77, %p78
      %p81 = scmp.ne.s32.totalorder %s64, %s80
      %p82 = scmp.eq.s32.totalorder %s18, 0
      %p83 = por %p81, %p82
      %s84 = ssub.s32 %s20, %s27
      %p85 = scmp.eq.s32.totalorder %s84, 0
      %s87 = sadd.s32 %s86, 1
      %s88 = scalar_select %p85, %s86, %s87
      %p91 = pneg %p85
      %p92 = scmp.eq.s32.totalorder %s12, 5
      %p93 = por %p91, %p92
      %p94 = scmp.ne.s32.totalorder %s86, %s89
      %p95 = scmp.eq.s32.totalorder %s12, 0
      %p96 = por %p94, %p95
      %p97 = scmp.ne.s32.totalorder %s86, %s89
      %p98 = scmp.eq.s32.totalorder %s17, 5
      %p99 = por %p97, %p98
      %p100 = scmp.ne.s32.totalorder %s89, %s90
      %p101 = scmp.eq.s32.totalorder %s17, 0
      %p102 = por %p100, %p101
      %p103 = scmp.ne.s32.totalorder %s89, %s90
      %p104 = scmp.eq.s32.totalorder %s18, 5
      %p105 = por %p103, %p104
      %p107 = scmp.ne.s32.totalorder %s90, %s106
      %p108 = scmp.eq.s32.totalorder %s18, 0
      %p109 = por %p107, %p108
      %s110 = ssub.s32 %s19, %s31
      %p111 = scmp.eq.s32.totalorder %s110, 0
      %s113 = sadd.s32 %s112, 1
      %s114 = scalar_select %p111, %s112, %s113
      %p117 = pneg %p111
      %p118 = scmp.eq.s32.totalorder %s12, 5
      %p119 = por %p117, %p118
      %p120 = scmp.ne.s32.totalorder %s112, %s115
      %p121 = scmp.eq.s32.totalorder %s12, 0
      %p122 = por %p120, %p121
      %p123 = scmp.ne.s32.totalorder %s112, %s115
      %p124 = scmp.eq.s32.totalorder %s17, 5
      %p125 = por %p123, %p124
      %p126 = scmp.ne.s32.totalorder %s115, %s116
      %p127 = scmp.eq.s32.totalorder %s17, 0
      %p128 = por %p126, %p127
      %p129 = scmp.ne.s32.totalorder %s115, %s116
      %p130 = scmp.eq.s32.totalorder %s18, 5
      %p131 = por %p129, %p130
      %p133 = scmp.ne.s32.totalorder %s116, %s132
      %p134 = scmp.eq.s32.totalorder %s18, 0
      %p135 = por %p133, %p134
      %p136 = scmp.le.s32.totalorder 1, %s12
      %p137 = scmp.lt.s32.totalorder %s12, 7
      %p138 = pnand %p136, %p137
      %p139 = pneg %p138
      // Predicated region
      $region9: #{tpu_custom_call.1} parent=5 // pred_check
        _
      $region10: #{tpu_custom_call.1} parent=5 // pred_check_branch
        %141 = sbr.rel (%p138) target = $region12
      $region11: #{tpu_custom_call.1} parent=5 // pred_region
        %s142 = ssub.s32 %s12, 1
      $region12: #{tpu_custom_call.1} parent=5 // pred_fallthru
        _
      %p143 = scmp.lt.s32.totalorder %s12, 6
      // Predicated region
      $region13: #{tpu_custom_call.1} parent=5 // pred_check
        %p144 = pneg %p143
      $region14: #{tpu_custom_call.1} parent=5 // pred_check_branch
        %146 = sbr.rel (%p144) target = $region16
      $region15: #{tpu_custom_call.1} parent=5 // pred_region
        // Predicated region
        $region17: #{tpu_custom_call.1} parent=15 // pred_check
          %p147 = pneg %p44
        $region18: #{tpu_custom_call.1} parent=15 // pred_check_branch
          %149 = sbr.rel (%p147) target = $region20
        $region19: #{tpu_custom_call.1} parent=15 // pred_region
          %p150 = scmp.lt.s32.totalorder %s19, 1
          %s151 = scalar_select %p150, %s19, 1
          %s152 = smul.addr %s151, 8
          %s153 = scalar_lea.vmem %s0, %s152
        $region20: #{tpu_custom_call.1} parent=15 // pred_fallthru
          _
        // Predicated region
        $region21: #{tpu_custom_call.1} parent=15 // pred_check
          %p154 = pneg %p70
        $region22: #{tpu_custom_call.1} parent=15 // pred_check_branch
          %156 = sbr.rel (%p154) target = $region24
        $region23: #{tpu_custom_call.1} parent=15 // pred_region
          %p157 = scmp.lt.s32.totalorder %s19, 1
          %s158 = scalar_select %p157, %s19, 1
          %s159 = smul.addr %s158, 4
          %s160 = scalar_lea.vmem %s1, %s159
        $region24: #{tpu_custom_call.1} parent=15 // pred_fallthru
          _
        // Predicated region
        $region25: #{tpu_custom_call.1} parent=15 // pred_check
          %p161 = pneg %p96
        $region26: #{tpu_custom_call.1} parent=15 // pred_check_branch
          %163 = sbr.rel (%p161) target = $region28
        $region27: #{tpu_custom_call.1} parent=15 // pred_region
          %s164 = sand.u32 %s86, 1
          %s165 = scalar_lea.sflag [#allocation6], %s164
          %s166 = sand.u32 %s86, 1
          %s167 = smul.addr %s166, 64
          %s168 = scalar_lea.vmem [#allocation5], %s167
          %s169 = smul.u32 16, %s20
          %171 = vsyncadd %s165, 0
          %s172 = smul.addr %s169, 4
          %s173 = scalar_lea.hbm %s2, %s172
          %s174 = sshll.u32 %s173, 4
          %s175 = int_to_ptr.hbm [resolvable:$true] %s174
          %s176 = sshll.u32 %s168, 4
          %s177 = int_to_ptr.vmem [resolvable:$true] %s176
          %182 = dma.hbm_to_vmem [thread:$0]  %s175, 1024, %s177, %s165, 64, 64, 4
        $region28: #{tpu_custom_call.1} parent=15 // pred_fallthru
          _
      $region16: #{tpu_custom_call.1} parent=5 // pred_fallthru
        _
      %p183 = scmp.le.s32.totalorder 1, %s12
      %p184 = scmp.lt.s32.totalorder %s12, 7
      %p185 = pnand %p183, %p184
      %p186 = pneg %p185
      // Predicated region
      $region29: #{tpu_custom_call.1} parent=5 // pred_check
        _
      $region30: #{tpu_custom_call.1} parent=5 // pred_check_branch
        %188 = sbr.rel (%p185) target = $region32
      $region31: #{tpu_custom_call.1} parent=5 // pred_region
        %s189 = ssub.s32 %s12, 1
        %s190 = sand.u32 %s89, 1
        %s191 = scalar_lea.sflag [#allocation6], %s190
        %s192 = sand.u32 %s89, 1
        %s193 = smul.addr %s192, 64
        %s194 = scalar_lea.vmem [#allocation5], %s193
        // Predicated region
        $region33: #{tpu_custom_call.1} parent=31 // pred_check
          %p195 = pneg %p102
        $region34: #{tpu_custom_call.1} parent=31 // pred_check_branch
          %197 = sbr.rel (%p195) target = $region36
        $region35: #{tpu_custom_call.1} parent=31 // pred_region
          %199 = dma.done %s191, 1024
        $region36: #{tpu_custom_call.1} parent=31 // pred_fallthru
          _
        %p200 = scmp.lt.s32.totalorder %s21, 1
        %s201 = scalar_select %p200, %s21, 1
        %s202 = smul.addr %s201, 8
        %s203 = scalar_lea.vmem %s0, %s202
        %p204 = pneg %p50
        %p205 = pneg %p47
        %p206 = scmp.lt.s32.totalorder %s21, 1
        %s207 = scalar_select %p206, %s21, 1
        %s208 = smul.addr %s207, 4
        %s209 = scalar_lea.vmem %s1, %s208
        %p210 = pneg %p76
        %p211 = pneg %p73
        %s212 = sand.u32 %s89, 1
        %s213 = scalar_lea.sflag [#allocation6], %s212
        %s214 = sand.u32 %s89, 1
        %s215 = smul.addr %s214, 64
        %s216 = scalar_lea.vmem [#allocation5], %s215
        %p217 = pneg %p102
        %p218 = pneg %p99
        %p219 = pneg %p128
        %p220 = pneg %p125
        %p221 = scmp.lt.s32.totalorder %s21, 1
        %s222 = scalar_select %p221, %s21, 1
        %s223 = smul.addr %s222, 8
        %s224 = scalar_lea.vmem %s3, %s223
        %p225 = scmp.lt.s32.totalorder %s21, 1
        %s226 = scalar_select %p225, %s21, 1
        %s227 = smul.addr %s226, 8
        %s228 = scalar_lea.vmem %s0, %s227
        %p229 = scmp.lt.s32.totalorder %s21, 1
        %s230 = scalar_select %p229, %s21, 1
        %s231 = smul.addr %s230, 4
        %s232 = scalar_lea.vmem %s1, %s231
        %s233 = smul.u32 16, %s22
        %p234 = scmp.lt.s32.totalorder %s21, 1
        %s235 = scalar_select %p234, %s21, 1
        %s236 = smul.addr %s235, 8
        %s237 = scalar_lea.vmem %s3, %s236
        %p238 = scmp.eq.s32.totalorder %s22, 0
        // Predicated region
        $region37: #{tpu_custom_call.1} parent=31 // pred_check
          %p239 = pneg %p238
        $region38: #{tpu_custom_call.1} parent=31 // pred_check_branch
          %241 = sbr.rel (%p239) target = $region40
        $region39: #{tpu_custom_call.1} parent=31 // pred_region
          %vm242 = vcmask 7168
          %243 = vst.msk [vmem:[#allocation2] sm:$0xff] %vm242, -1e+30
          %244 = vst.msk [vmem:[#allocation3] sm:$0xff] %vm242, 0.0
          %245 = vst.msk [vmem:[#allocation4] sm:$0xff] %vm242, 0.0
        $region40: #{tpu_custom_call.1} parent=31 // pred_fallthru
          _
        %v246 = vld [vmem:[%s232] sm:$0xf]
        %v247 = vld [vmem:[%s194] sm:$0xf]
        %v248 = vld [vmem:[%s194 + $0x4] sm:$0xf]
        %v249 = vld [vmem:[%s194 + $0x8] sm:$0xf]
        %v250 = vld [vmem:[%s194 + $0xc] sm:$0xf]
        %v251 = vld [vmem:[%s194 + $0x10] sm:$0xf]
        %v252 = vld [vmem:[%s194 + $0x14] sm:$0xf]
        %v253 = vld [vmem:[%s194 + $0x18] sm:$0xf]
        %v254 = vld [vmem:[%s194 + $0x1c] sm:$0xf]
        %v255 = vld [vmem:[%s194 + $0x20] sm:$0xf]
        %v256 = vld [vmem:[%s194 + $0x24] sm:$0xf]
        %v257 = vld [vmem:[%s194 + $0x28] sm:$0xf]
        %v258 = vld [vmem:[%s194 + $0x2c] sm:$0xf]
        %v259 = vld [vmem:[%s194 + $0x30] sm:$0xf]
        %v260 = vld [vmem:[%s194 + $0x34] sm:$0xf]
        %v261 = vld [vmem:[%s194 + $0x38] sm:$0xf]
        %v262 = vld [vmem:[%s194 + $0x3c] sm:$0xf]
        %v279 = vunpack.c.l.b16 %v247
        %v280 = vunpack.c.l.b16 %v248
        %v281 = vunpack.c.l.b16 %v249
        %v282 = vunpack.c.l.b16 %v250
        %v283 = vunpack.c.l.b16 %v251
        %v284 = vunpack.c.l.b16 %v252
        %v285 = vunpack.c.l.b16 %v253
        %v286 = vunpack.c.l.b16 %v254
        %v287 = vunpack.c.l.b16 %v255
        %v288 = vunpack.c.l.b16 %v256
        %v289 = vunpack.c.l.b16 %v257
        %v290 = vunpack.c.l.b16 %v258
        %v291 = vunpack.c.l.b16 %v259
        %v292 = vunpack.c.l.b16 %v260
        %v293 = vunpack.c.l.b16 %v261
        %v294 = vunpack.c.l.b16 %v262
        %v295 = vpack.c.b16 %v280, %v279
        %v296 = vpack.c.b16 %v282, %v281
        %v297 = vpack.c.b16 %v284, %v283
        %v298 = vpack.c.b16 %v286, %v285
        %v299 = vpack.c.b16 %v288, %v287
        %v300 = vpack.c.b16 %v290, %v289
        %v301 = vpack.c.b16 %v292, %v291
        %v302 = vpack.c.b16 %v294, %v293
        %311 = vmatpush.bf16.xpose.msra.mxu0 %v302
        %312 = vmatpush.bf16.xpose.msra.mxu0 %v301
        %313 = vmatpush.bf16.xpose.msra.mxu0 %v300
        %314 = vmatpush.bf16.xpose.msra.mxu0 %v299
        %315 = vmatpush.bf16.xpose.msra.mxu0 %v298
        %316 = vmatpush.bf16.xpose.msra.mxu0 %v297
        %317 = vmatpush.bf16.xpose.msra.mxu0 %v296
        %318 = vmatpush.bf16.xpose.msra.mxu0 %v295
        %319 = vmatmul.bf16.gmra.mxu0 %v246
        %v320 = vpop.f32.mrf.mxu0
        %v321 = vadd.f32 0.0, %v320
        %v322 = vpop.f32.mrf.mxu0
        %323 = vdwg.mxu0
        %v324 = vlaneseq
        %v325 = vand.u32 %v324, 127
        %v326 = vld [vmem:[%s228] sm:$0xff]
        %v327 = vld [vmem:[#allocation4] sm:$0xff]
        %s328 = smul.u32 %s22, 128
        %v329 = vstv %s328
        %v330 = vsub.s32 %v326, %v329
        %331 = vset.pattern.permute.xlu0 0
        %332 = vperm.xlu0 %331, %v330
        %v333 = vpop.permute.xlu0 %332
        %vm334 = vcmp.eq.s32.totalorder %v325, %v333
        %v335 = vsel %vm334, %v321, 0.0
        %336 = vadd.xlane.f32.xlu0 %v335
        %v337 = vpop.xlane.xlu0 %336
        %v338 = vadd.f32 %v327, %v337
        %vm339 = vcmask 7168
        %340 = vst.msk [vmem:[#allocation4] sm:$0xff] %vm339, %v338
        %v341 = vld [vmem:[#allocation2] sm:$0xff]
        %342 = vmax.xlane.f32.xlu0 %v321
        %v343 = vpop.xlane.xlu0 %342
        %v344 = vmax.f32 %v341, %v343
        %v345 = vld [vmem:[#allocation3] sm:$0xff]
        %v346 = vsub.f32 %v341, %v344
        %v347 = vmul.f32 %v346, 1.442695
        %v348 = vpow.pop %v347
        %v349 = vmul.f32 %v345, %v348
        %351 = vset.pattern.permute.xlu0 0
        %352 = vperm.xlu0 %351, %v344
        %v353 = vpop.permute.xlu0 %352
        %v355 = vsub.f32 %v321, %v353
        %v356 = vmul.f32 %v355, 1.442695
        %v357 = vpow.pop %v356
        %358 = vadd.xlane.f32.xlu0 %v357
        %v359 = vpop.xlane.xlu0 %358
        %v360 = vadd.f32 %v349, %v359
        %361 = vst.msk [vmem:[#allocation3] sm:$0xff] %vm339, %v360
        %362 = vst.msk [vmem:[#allocation2] sm:$0xff] %vm339, %v344
        %p363 = scmp.eq.s32.totalorder %s22, 2
        // Predicated region
        $region41: #{tpu_custom_call.1} parent=31 // pred_check
          %p364 = pneg %p363
        $region42: #{tpu_custom_call.1} parent=31 // pred_check_branch
          %366 = sbr.rel (%p364) target = $region44
        $region43: #{tpu_custom_call.1} parent=31 // pred_region
          %v367 = vld [vmem:[#allocation2] sm:$0xff]
          %v368 = vld [vmem:[#allocation3] sm:$0xff]
          %v369 = vlog2.pop %v368
          %v370 = vmul.f32 %v369, 0.6931472
          %v371 = vadd.f32 %v367, %v370
          %vm372 = vcmp.ne.s32.totalorder %v326, 4294967196
          %v373 = vld [vmem:[#allocation4] sm:$0xff]
          %v374 = vsub.f32 %v371, %v373
          %v375 = vsel %vm372, %v374, 0.0
          %376 = vst.msk [vmem:[%s237] sm:$0xff] %vm339, %v375
        $region44: #{tpu_custom_call.1} parent=31 // pred_fallthru
          _
        %p377 = scmp.lt.s32.totalorder %s21, 1
        %s378 = scalar_select %p377, %s21, 1
        %s379 = smul.addr %s378, 8
        %s380 = scalar_lea.vmem %s3, %s379
        // Predicated region
        $region45: #{tpu_custom_call.1} parent=31 // pred_check
          %p381 = pneg %p125
        $region46: #{tpu_custom_call.1} parent=31 // pred_check_branch
          %383 = sbr.rel (%p381) target = $region48
        $region47: #{tpu_custom_call.1} parent=31 // pred_region
          _
        $region48: #{tpu_custom_call.1} parent=31 // pred_fallthru
          _
      $region32: #{tpu_custom_call.1} parent=5 // pred_fallthru
        _
      %p384 = scmp.le.s32.totalorder 2, %s12
      // Predicated region
      $region49: #{tpu_custom_call.1} parent=5 // pred_check
        %p385 = pneg %p384
      $region50: #{tpu_custom_call.1} parent=5 // pred_check_branch
        %387 = sbr.rel (%p385) target = $region52
      $region51: #{tpu_custom_call.1} parent=5 // pred_region
        %s388 = ssub.s32 %s12, 2
        // Predicated region
        $region53: #{tpu_custom_call.1} parent=51 // pred_check
          %p389 = pneg %p131
        $region54: #{tpu_custom_call.1} parent=51 // pred_check_branch
          %391 = sbr.rel (%p389) target = $region56
        $region55: #{tpu_custom_call.1} parent=51 // pred_region
          %p392 = scmp.lt.s32.totalorder %s23, 1
          %s393 = scalar_select %p392, %s23, 1
          %s394 = smul.addr %s393, 8
          %s395 = scalar_lea.vmem %s3, %s394
        $region56: #{tpu_custom_call.1} parent=51 // pred_fallthru
          _
      $region52: #{tpu_custom_call.1} parent=5 // pred_fallthru
        _
    $region6: #{tpu_custom_call.1} parent=1 // loop_footer
      %s16 = sadd.s32 1, %s12
    $region7: #{tpu_custom_call.1} parent=1 // loop_footer_branch
      %11 = sbr.rel target = $region3
    $region8: #{tpu_custom_call.1} parent=1 // loop_exit
      _
    %396 = vsyncpa [#allocation6], 1
    %s397 = scalar_lea.sflag [#allocation6], 1
    %398 = vsyncpa %s397, 1

</llo_original>
